<compile_context>
chip_gen: v7x
topology: tpu7x:2x2x1
jax: 0.10.0
libtpu: 0.0.40
codegen_flags: <defaults>
</compile_context>

<pallas_src>
import math

import numpy as np
import jax
import jax.numpy as jnp
from jax import lax
from jax.experimental import pallas as pl
from jax.experimental.pallas import tpu as pltpu

_EPS_F32 = float(np.finfo(np.float32).tiny)
_LOG_EPS_F32 = float(np.log(_EPS_F32))

REG_TYPES = ("LS", "CP", "CL")

_F32_TEMPS = 4  # budgeted live (tile, C) f32 temporaries per block


def _vmem_budget_bytes():
    """Per-kernel scoped-VMEM budget, generation aware (v7x: 64 MiB physical)."""
    try:
        cap = int(pltpu.get_tpu_info().vmem_capacity_bytes)
    except Exception:
        cap = 64 << 20          # conservative fallback: assume smallest generation
    return int(min((cap * 3) // 4, 96 << 20))


def _pick_batch_tile(bs, c, in_dtype, budget_bytes):
    """Largest batch tile whose double-buffered input block + f32 temps fit VMEM."""
    itemsize = jnp.dtype(in_dtype).itemsize
    sub = 8 if itemsize >= 4 else 16            # sub-32-bit dtypes pack sublanes
    per_row = c * (2 * itemsize + _F32_TEMPS * 4)   # 2x input buffers + f32 temps
    max_rows = max(int(budget_bytes // max(per_row, 1)), sub)
    if bs % sub != 0:
        return bs                               # single ragged block; Mosaic masks
    best = sub
    t = sub
    while t <= bs:
        if bs % t == 0 and t <= max_rows:
            best = t
        t += sub
    # TODO(synk): if even `sub` rows do not fit (huge vocab), tile the class axis.
    # Leave megacore (v7x: 2 TCs) at least two blocks when the batch is large.
    if best == bs and bs >= 1024 and (bs // 2) % sub == 0:
        best = bs // 2
    return best


def make_loss_with_output_dist_reg(
    num_classes,
    reg_type="CP",
    reg_coef=0.1,
    reduction="mean",      # reduction of the regularization term: 'mean' | 'sum'
    class_index=0,         # used by Conflictual Loss (CL); -1 = random class
    ce_weight=1.0,
    ce_reduction="mean",   # nn.CrossEntropyLoss default reduction
    tile_b=None,           # optional explicit batch tile
):
    """Returns loss_fn(logits[BS, C], targets[BS] int) -> scalar f32."""
    reg_type = None if reg_type is None else reg_type.upper()
    if reg_type is not None and reg_type not in REG_TYPES:
        reg_type = None  # matches __new__ fallback to plain CrossEntropyLoss
    log_c = float(math.log(num_classes))
    coef = float(reg_coef) if reg_type is not None else 0.0

    def loss_fn(logits, targets, class_index_override=None):
        bs, c = logits.shape
        assert c == num_classes, "logits last dim must equal num_classes"
        in_itemsize = jnp.dtype(logits.dtype).itemsize
        sub = 8 if in_itemsize >= 4 else 16
        budget = _vmem_budget_bytes()

        # --- VMEM-aware batch tiling (class axis stays whole) ---
        tile = tile_b if tile_b is not None else _pick_batch_tile(
            bs, c, logits.dtype, budget)
        if not (tile == bs or (bs % tile == 0 and tile % sub == 0)):
            tile = bs
        nb = bs // tile

        ce_scale = 1.0 / bs if ce_reduction != "sum" else 1.0
        reg_scale = 1.0 / bs if reduction != "sum" else 1.0
        a_ce = float(ce_weight) * ce_scale     # scale on CE contribution
        a_rg = coef * reg_scale                # scale on regularizer contribution

        # class index for CL (trace-time python; -1 -> random, like randint fallback)
        ci = class_index if class_index_override is None else class_index_override
        if isinstance(ci, int) and ci == -1:
            # TODO(synk): PyTorch re-draws the random class each forward; here the
            # draw is frozen at trace time.
            ci = int(np.random.randint(0, num_classes))
        ci_arr = jnp.asarray([ci], dtype=jnp.int32)     # scalar-prefetched to SMEM

        tgt2d = targets.astype(jnp.int32).reshape(bs, 1)  # tiny int32 column

        # Keep the whole (bs,1) target column resident in VMEM (single DMA) unless
        # its lane-padded footprint is non-trivial; otherwise stream per-block.
        targets_resident = (nb > 1) and (bs * 128 * 4) <= (budget // 8)
        align = tile & (-tile)   # largest power-of-two divisor of tile (>= 8 if nb>1)

        def kernel(ci_ref, tgt_ref, logits_ref, out_ref):
            x = logits_ref[...].astype(jnp.float32)     # (TB, C): cast in-kernel
            tb, cc = x.shape
            if targets_resident:
                row0 = pl.multiple_of(pl.program_id(0) * tile, align)
                tgt = tgt_ref[pl.ds(row0, tile), :]     # (TB, 1)
            else:
                tgt = tgt_ref[...]                      # (TB, 1)

            # numerically-stable softmax pieces (lane-axis reductions)
            m = jnp.max(x, axis=-1, keepdims=True)
            sh = x - m                                  # shifted logits
            ex = jnp.exp(sh)
            denom = jnp.sum(ex, axis=-1, keepdims=True)  # (TB, 1)
            log_denom = jnp.log(denom)                   # (TB, 1)

            lane = lax.broadcasted_iota(jnp.int32, (tb, cc), 1)
            tgt_mask = lane == tgt                       # (TB, C)

            # One fused per-element contribution matrix -> a single full (TB,C)
            # sum; per-row CE is log_denom - sh[target], regularizer folded in.
            if reg_type == "LS":
                lp = jnp.maximum(sh - log_denom, _LOG_EPS_F32)   # ~ log(p + eps)
                contrib = (-(a_rg / log_c)) * lp \
                    - a_ce * jnp.where(tgt_mask, sh, 0.0)
                ld_coef = a_ce
                const = -a_rg * float(tb) * log_c
            elif reg_type == "CP":
                # sum_c p*log(p+eps) ~= (sum_c ex*sh)/denom - log_denom
                inv_denom = pl.reciprocal(denom, approx=True)    # EUP
                contrib = (a_rg * inv_denom) * (ex * sh) \
                    - a_ce * jnp.where(tgt_mask, sh, 0.0)
                ld_coef = a_ce - a_rg
                const = a_rg * float(tb) * log_c
            elif reg_type == "CL":
                cls_mask = lane == ci_ref[0]
                w = jnp.where(tgt_mask, a_ce, 0.0) + jnp.where(cls_mask, a_rg, 0.0)
                contrib = -(w * sh)
                ld_coef = a_ce + a_rg
                const = 0.0
            else:  # plain cross entropy
                contrib = -a_ce * jnp.where(tgt_mask, sh, 0.0)
                ld_coef = a_ce
                const = 0.0

            total = (jnp.sum(contrib, keepdims=True)
                     + ld_coef * jnp.sum(log_denom, keepdims=True)
                     + const)                            # (1, 1)
            # Lane-dense, unmasked (8,128) partial-sum block for this grid step.
            out_ref[...] = jnp.broadcast_to(total, (8, 128)).astype(jnp.float32)

        if targets_resident:
            tgt_spec = pl.BlockSpec((bs, 1), lambda b, ci_ref: (0, 0))
        else:
            tgt_spec = pl.BlockSpec((tile, 1), lambda b, ci_ref: (b, 0))

        grid_spec = pltpu.PrefetchScalarGridSpec(
            num_scalar_prefetch=1,
            grid=(nb,),
            in_specs=[
                tgt_spec,                                            # targets
                pl.BlockSpec((tile, c), lambda b, ci_ref: (b, 0)),   # logits
            ],
            # independent per-block partials -> "parallel" grid (megacore on v7x)
            out_specs=pl.BlockSpec((8, 128), lambda b, ci_ref: (b, 0)),
        )

        cost = pl.CostEstimate(
            flops=int(8 * bs * c),
            transcendentals=int(bs * c + 2 * bs),
            bytes_accessed=int(bs * c * in_itemsize + bs * 4 + nb * 8 * 128 * 4 + 4),
        )

        partials = pl.pallas_call(
            kernel,
            out_shape=jax.ShapeDtypeStruct((8 * nb, 128), jnp.float32),
            grid_spec=grid_spec,
            compiler_params=pltpu.CompilerParams(
                dimension_semantics=("parallel",),
                vmem_limit_bytes=int(budget),
            ),
            cost_estimate=cost,
        )(ci_arr, tgt2d, logits)

        # Each block wrote its partial sum broadcast over an (8,128) tile; pick one
        # representative element per block and finish the (tiny) reduction in XLA.
        return jnp.sum(partials[::8, 0])

    return loss_fn


# ----------------------- pure-JAX reference for checking -----------------------
def _reference_loss(logits, targets, reg_type, reg_coef, reduction, class_index,
                    ce_weight=1.0):
    logits = logits.astype(jnp.float32)
    c = logits.shape[-1]
    log_probs = jax.nn.log_softmax(logits, axis=-1)
    probs = jax.nn.softmax(logits, axis=-1)
    ce_i = -jnp.take_along_axis(log_probs, targets[:, None].astype(jnp.int32),
                                axis=-1)[:, 0]
    ce = jnp.mean(ce_i)
    log_c = math.log(c)
    rt = None if reg_type is None else reg_type.upper()
    if rt == "LS":
        reg_i = -(log_c + jnp.sum(jnp.log(probs + _EPS_F32), axis=-1) / log_c)
    elif rt == "CP":
        reg_i = log_c + jnp.sum(probs * jnp.log(probs + _EPS_F32), axis=-1)
    elif rt == "CL":
        reg_i = -log_probs[:, class_index]
    else:
        reg_i = jnp.zeros_like(ce_i)
    reg = jnp.sum(reg_i) if reduction == "sum" else jnp.mean(reg_i)
    coef = reg_coef if rt in REG_TYPES else 0.0
    return ce_weight * ce + coef * reg


if __name__ == "__main__":
    key = jax.random.PRNGKey(0)
    k_logit, k_tgt = jax.random.split(key)

    ok = True
    TOL = dict(rtol=5e-3, atol=5e-3)   # f32 + approx reciprocal vs f32 reference

    # ---- small f32 case, all regularizer types (single block) ----
    BS, C = 8, 16
    logits = jax.random.normal(k_logit, (BS, C), dtype=jnp.float32)
    targets = jax.random.randint(k_tgt, (BS,), 0, C, dtype=jnp.int32)

    configs = [
        dict(reg_type="LS", reg_coef=0.25, reduction="mean", class_index=0),
        dict(reg_type="CP", reg_coef=0.10, reduction="sum", class_index=0),
        dict(reg_type="CL", reg_coef=0.05, reduction="mean", class_index=3),
        dict(reg_type=None, reg_coef=0.0, reduction="mean", class_index=0),
    ]
    for cfg in configs:
        loss_fn = make_loss_with_output_dist_reg(num_classes=C, **cfg)
        out = jax.block_until_ready(loss_fn(logits, targets))
        ref = jax.block_until_ready(_reference_loss(logits, targets, **cfg))
        if not np.allclose(np.asarray(out), np.asarray(ref), **TOL):
            ok = False
            print(f"MISMATCH {cfg['reg_type']}: kernel={float(out)} ref={float(ref)}")

    # ---- bf16 logits, multi-block batch grid (partial-sum / megacore path) ----
    BS2, C2 = 32, 128
    logits2 = jax.random.normal(k_logit, (BS2, C2), dtype=jnp.float32)
    targets2 = jax.random.randint(k_tgt, (BS2,), 0, C2, dtype=jnp.int32)
    fn_bf16 = make_loss_with_output_dist_reg(
        num_classes=C2, reg_type="CP", reg_coef=0.1, reduction="mean",
        class_index=0, tile_b=16)
    out_bf16 = jax.block_until_ready(fn_bf16(logits2.astype(jnp.bfloat16), targets2))
    ref_bf16 = jax.block_until_ready(_reference_loss(
        logits2.astype(jnp.bfloat16).astype(jnp.float32), targets2,
        reg_type="CP", reg_coef=0.1, reduction="mean", class_index=0))
    if not np.allclose(np.asarray(out_bf16), np.asarray(ref_bf16), **TOL):
        ok = False
        print(f"MISMATCH bf16/tiled: kernel={float(out_bf16)} ref={float(ref_bf16)}")

    # ---- non-multiple-of-128 class count, multi-block, resident targets ----
    BS3, C3 = 48, 1000
    k3a, k3b = jax.random.split(jax.random.PRNGKey(7))
    logits3 = jax.random.normal(k3a, (BS3, C3), dtype=jnp.float32)
    targets3 = jax.random.randint(k3b, (BS3,), 0, C3, dtype=jnp.int32)
    fn_ls = make_loss_with_output_dist_reg(
        num_classes=C3, reg_type="LS", reg_coef=0.25, reduction="mean",
        class_index=0, tile_b=16)
    out_ls = jax.block_until_ready(fn_ls(logits3, targets3))
    ref_ls = jax.block_until_ready(_reference_loss(
        logits3, targets3, reg_type="LS", reg_coef=0.25, reduction="mean",
        class_index=0))
    if not np.allclose(np.asarray(out_ls), np.asarray(ref_ls), **TOL):
        ok = False
        print(f"MISMATCH LS/C=1000: kernel={float(out_ls)} ref={float(ref_ls)}")

    if ok:
        print("KERNEL_OK")
</pallas_src>

<mosaic_0001>
module attributes {stable_mosaic.version = 11 : i64} {
  func.func @kernel(%arg0: i32, %arg1: memref<1xi32, #tpu.memory_space<smem>>, %arg2: memref<8x1xi32, #tpu.memory_space<vmem>>, %arg3: memref<8x16xf32, #tpu.memory_space<vmem>>, %arg4: memref<8x128xf32, #tpu.memory_space<vmem>>) attributes {dimension_semantics = [#tpu.dimension_semantics<parallel>], iteration_bounds = array<i64: 1>, scalar_prefetch = 1 : i64, scratch_operands = 0 : i64, tpu.core_type = #tpu.core_type<tc>, window_params = [{transform_indices = @transform_0, window_bounds = array<i64: 8, 1>}, {transform_indices = @transform_1, window_bounds = array<i64: 8, 16>}, {transform_indices = @transform_2, window_bounds = array<i64: 8, 128>}]} {
    %c0 = arith.constant 0 : index
    %c0_0 = arith.constant 0 : index
    %0 = vector.load %arg3[%c0, %c0_0] : memref<8x16xf32, #tpu.memory_space<vmem>>, vector<8x16xf32>
    %c0_1 = arith.constant 0 : index
    %c0_2 = arith.constant 0 : index
    %1 = vector.load %arg2[%c0_1, %c0_2] : memref<8x1xi32, #tpu.memory_space<vmem>>, vector<8x1xi32>
    %cst = arith.constant dense<0xFF800000> : vector<8xf32>
    %2 = vector.multi_reduction <maximumf>, %0, %cst [1] : vector<8x16xf32> to vector<8xf32>
    %3 = vector.shape_cast %2 : vector<8xf32> to vector<8x1xf32>
    %4 = vector.broadcast %3 : vector<8x1xf32> to vector<8x16xf32>
    %5 = arith.subf %0, %4 : vector<8x16xf32>
    %6 = math.exp %5 : vector<8x16xf32>
    %cst_3 = arith.constant dense<0.000000e+00> : vector<8xf32>
    %7 = vector.multi_reduction <add>, %6, %cst_3 [1] : vector<8x16xf32> to vector<8xf32>
    %8 = vector.shape_cast %7 : vector<8xf32> to vector<8x1xf32>
    %9 = math.log %8 : vector<8x1xf32>
    %10 = tpu.iota {dimensions = array<i32: 1>} : vector<8x16xi32>
    %11 = vector.broadcast %1 : vector<8x1xi32> to vector<8x16xi32>
    %12 = arith.cmpi eq, %10, %11 : vector<8x16xi32>
    %13 = vector.broadcast %9 : vector<8x1xf32> to vector<8x16xf32>
    %14 = arith.subf %5, %13 : vector<8x16xf32>
    %cst_4 = arith.constant -87.3365478 : f32
    %15 = vector.broadcast %cst_4 : f32 to vector<8x16xf32>
    %16 = arith.maximumf %14, %15 : vector<8x16xf32>
    %cst_5 = arith.constant -0.0112710549 : f32
    %17 = vector.broadcast %cst_5 : f32 to vector<8x16xf32>
    %18 = arith.mulf %17, %16 : vector<8x16xf32>
    %cst_6 = arith.constant 0.000000e+00 : f32
    %19 = vector.broadcast %cst_6 : f32 to vector<8x16xf32>
    %20 = arith.select %12, %5, %19 : vector<8x16xi1>, vector<8x16xf32>
    %cst_7 = arith.constant 1.250000e-01 : f32
    %21 = vector.broadcast %cst_7 : f32 to vector<8x16xf32>
    %22 = arith.mulf %21, %20 : vector<8x16xf32>
    %23 = arith.subf %18, %22 : vector<8x16xf32>
    %24 = vector.shape_cast %23 : vector<8x16xf32> to vector<1x8x16xf32>
    %cst_8 = arith.constant dense<0.000000e+00> : vector<1xf32>
    %25 = vector.multi_reduction <add>, %24, %cst_8 [1, 2] : vector<1x8x16xf32> to vector<1xf32>
    %26 = vector.shape_cast %25 : vector<1xf32> to vector<1x1x1xf32>
    %27 = vector.extract %26[0, 0, 0] : f32 from vector<1x1x1xf32>
    %28 = vector.broadcast %27 : f32 to vector<1x1xf32>
    %29 = vector.shape_cast %9 : vector<8x1xf32> to vector<1x8x1xf32>
    %cst_9 = arith.constant dense<0.000000e+00> : vector<1xf32>
    %30 = vector.multi_reduction <add>, %29, %cst_9 [1, 2] : vector<1x8x1xf32> to vector<1xf32>
    %31 = vector.shape_cast %30 : vector<1xf32> to vector<1x1x1xf32>
    %32 = vector.extract %31[0, 0, 0] : f32 from vector<1x1x1xf32>
    %33 = vector.broadcast %32 : f32 to vector<1x1xf32>
    %cst_10 = arith.constant 1.250000e-01 : f32
    %34 = vector.broadcast %cst_10 : f32 to vector<1x1xf32>
    %35 = arith.mulf %34, %33 : vector<1x1xf32>
    %36 = arith.addf %28, %35 : vector<1x1xf32>
    %cst_11 = arith.constant -0.693147182 : f32
    %37 = vector.broadcast %cst_11 : f32 to vector<1x1xf32>
    %38 = arith.addf %36, %37 : vector<1x1xf32>
    %39 = vector.shape_cast %38 : vector<1x1xf32> to vector<1x1xf32>
    %40 = vector.broadcast %39 : vector<1x1xf32> to vector<8x128xf32>
    %c0_12 = arith.constant 0 : index
    %c0_13 = arith.constant 0 : index
    %41 = vector.load %arg4[%c0_12, %c0_13] : memref<8x128xf32, #tpu.memory_space<vmem>>, vector<8x128xf32>
    tpu.vector_store %arg4[%c0_12, %c0_13], %40 {strides = array<i32>} : memref<8x128xf32, #tpu.memory_space<vmem>>, vector<8x128xf32>,
    return
  }
  func.func @transform_0(%arg0: i32, %arg1: memref<1xi32, #tpu.memory_space<smem>>) -> (i32, i32) {
    %c0_i32 = arith.constant 0 : i32
    %c0_i32_0 = arith.constant 0 : i32
    return %arg0, %c0_i32 : i32, i32
  }
  func.func @transform_1(%arg0: i32, %arg1: memref<1xi32, #tpu.memory_space<smem>>) -> (i32, i32) {
    %c0_i32 = arith.constant 0 : i32
    %c0_i32_0 = arith.constant 0 : i32
    return %arg0, %c0_i32 : i32, i32
  }
  func.func @transform_2(%arg0: i32, %arg1: memref<1xi32, #tpu.memory_space<smem>>) -> (i32, i32) {
    %c0_i32 = arith.constant 0 : i32
    %c0_i32_0 = arith.constant 0 : i32
    return %arg0, %c0_i32 : i32, i32
  }
}

</mosaic_0001>

<llo_original>
// kernel: tpu_custom_call.1
$region0: #{tpu_custom_call.1}
  #allocation0 [shape = 'u32[]', space=smem, size = 0x4, offset = 0x4, fixed_abs, tag = 'smem constant byte address 0x4 - core index']
  #allocation1 [shape = 'u32[144,128]{1,0:T(1,128)}', space=vmem, size = 0x12000, scoped, tag = 'internal scratch']
  #allocation2 [shape = 's32[1]{0}', space=sflag, size = 0x4, scoped, tag = 'scoped memory for tpu_custom_call.1']
  #allocation3 [shape = 's32[1]{0:T(128)S(6)}', space=smem, size = 0x200, scoped, tag = 'prefetched SMEM operand 0']
  %s0 = inlined_call_operand.<no memory space> [shape: s32[1], index: 0, kind: input, shape index: {}]
  %s1 = inlined_call_operand.vmem [shape: s32[8,1], index: 1, kind: input, shape index: {}]
  %s2 = inlined_call_operand.vmem [shape: f32[8,16], index: 2, kind: input, shape index: {}]
  %s3 = inlined_call_operand.hbm [shape: f32[8,128], index: 3, kind: output, shape index: {}]
  %s4 = sld [smem:[#allocation0]]
  $region18: #{tpu_custom_call.1} parent=0
    _
  %s6 = ssub.s32 1, %s4
  %s7 = scalar_select 0, %s6, %s4
  %8 = sst [smem:[#allocation3]] %s0
  $region1: #{tpu_custom_call.1} parent=0
    #allocation4 [shape = 'u8[4096]{0}', space=vmem, size = 0x1000, scoped, tag = 'output window, operand 0, single buffered']
    #allocation5 [shape = 's32[1]{0}', space=sflag, size = 0x4, scoped, tag = 'scoped memory for tpu_custom_call.1']
    %9 = vsyncpa [#allocation5], 0
    // Predicated region
    $region2: #{tpu_custom_call.1} parent=1 // pred_check
      _
    $region3: #{tpu_custom_call.1} parent=1 // pred_check_branch
      %11 = sbr.rel (0) target = $region5
    $region4: #{tpu_custom_call.1} parent=1 // pred_region
      _
    $region5: #{tpu_custom_call.1} parent=1 // pred_fallthru
      _
    // Predicated region
    $region6: #{tpu_custom_call.1} parent=1 // pred_check
      _
    $region7: #{tpu_custom_call.1} parent=1 // pred_check_branch
      %13 = sbr.rel (0) target = $region9
    $region8: #{tpu_custom_call.1} parent=1 // pred_region
      _
    $region9: #{tpu_custom_call.1} parent=1 // pred_fallthru
      _
    %v14 = vld [vmem:[%s2] sm:$0xff]
    %v15 = vld [vmem:[%s1] sm:$0xff]
    %vm16 = vcmask 130048
    %v17 = vsel %vm16, %v14, -inf
    %18 = vmax.xlane.f32.xlu0 %v17
    %v19 = vpop.xlane.xlu0 %18
    %v20 = vsub.f32 %v14, %v19
    %v21 = vmul.f32 %v20, 1.442695
    %v22 = vpow.pop %v21
    %v23 = vsel %vm16, %v22, 0.0
    %24 = vadd.xlane.f32.xlu0 %v23
    %v25 = vpop.xlane.xlu0 %24
    %v26 = vlog2.pop %v25
    %v27 = vmul.f32 %v26, 0.6931472
    %v28 = vlaneseq
    %v29 = vand.u32 %v28, 127
    %30 = vset.pattern.permute.xlu0 0
    %31 = vperm.xlu0 %30, %v15
    %v32 = vpop.permute.xlu0 %31
    %vm33 = vcmp.eq.s32.totalorder %v29, %v32
    %v34 = vsub.f32 %v20, %v27
    %v35 = vmax.f32 %v34, -87.33655
    %v36 = vmul.f32 %v35, -0.011271055
    %v37 = vsel %vm33, %v20, 0.0
    %v38 = vmul.f32 %v37, 0.125
    %v39 = vsub.f32 %v36, %v38
    %v40 = vsel %vm16, %v39, 0.0
    %41 = vadd.xlane.f32.xlu0 %v40
    %v42 = vpop.xlane.xlu0 %41
    %v43 = vrot.slane %v42, 4
    %v44 = vadd.f32 %v42, %v43
    %v45 = vrot.slane %v44, 2
    %v46 = vadd.f32 %v44, %v45
    %v47 = vrot.slane %v46, 1
    %v48 = vadd.f32 %v46, %v47
    %s49 = vtos %v48
    %v50 = vstv %s49
    %vm51 = vcmask 7168
    %v52 = vsel %vm51, %v27, 0.0
    %53 = vadd.xlane.f32.xlu0 %v52
    %v54 = vpop.xlane.xlu0 %53
    %v55 = vrot.slane %v54, 4
    %v56 = vadd.f32 %v54, %v55
    %v57 = vrot.slane %v56, 2
    %v58 = vadd.f32 %v56, %v57
    %v59 = vrot.slane %v58, 1
    %v60 = vadd.f32 %v58, %v59
    %s61 = vtos %v60
    %v62 = vstv %s61
    %v63 = vmul.f32 %v62, 0.125
    %v64 = vadd.f32 %v50, %v63
    %v65 = vadd.f32 %v64, -0.6931472
    %66 = vst [vmem:[#allocation4] sm:$0xff] %v65
    // Predicated region
    $region10: #{tpu_custom_call.1} parent=1 // pred_check
      _
    $region11: #{tpu_custom_call.1} parent=1 // pred_check_branch
      %68 = sbr.rel (0) target = $region13
    $region12: #{tpu_custom_call.1} parent=1 // pred_region
      %s70 = ssub.s32 128, 128
      %71 = vsyncadd [#allocation5], %s70
      %s73 = sshll.u32 [#allocation4], 4
      %s74 = int_to_ptr.vmem [resolvable:$true] %s73
      %76 = dma.vmem_to_hbm [thread:$0]  %s74, 128, %s3, [#allocation5]
    $region13: #{tpu_custom_call.1} parent=1 // pred_fallthru
      _
    // Predicated region
    $region14: #{tpu_custom_call.1} parent=1 // pred_check
      _
    $region15: #{tpu_custom_call.1} parent=1 // pred_check_branch
      %78 = sbr.rel (0) target = $region17
    $region16: #{tpu_custom_call.1} parent=1 // pred_region
      %79 = dma.done [#allocation5], 128
    $region17: #{tpu_custom_call.1} parent=1 // pred_fallthru
      _
    %80 = vsyncpa [#allocation5], 1

</llo_original>
